<compile_context>
chip_gen: v7x
topology: tpu7x:2x2x1
jax: 0.10.0
libtpu: 0.0.40
codegen_flags: <defaults>
</compile_context>

<pallas_src>
import functools

import jax
import jax.numpy as jnp
from jax.experimental import pallas as pl
from jax.experimental.pallas import tpu as pltpu


_LANE = 128      # lane width: batch-tile granularity in the transposed layout
_SMALL_K = 8     # contractions with K <= this use unrolled VPU FMAs, not MXU
_TM_CAP = 4096   # max batch rows per grid step


def _round_up(n, m):
    return ((n + m - 1) // m) * m


def _device_kind():
    try:
        return jax.devices()[0].device_kind.lower()
    except Exception:
        return ""


def _num_tensorcores():
    # v7x exposes 2 TensorCores per chip; v5e/v6e have 1.
    return 2 if "v7" in _device_kind() else 1


def _default_use_bf16():
    # bf16 MXU operands cut vmatmul pushes ~3x on v6e/v7x and halve operand
    # traffic; keep f32 on v5e (and unknown backends) so results stay tight.
    kind = _device_kind()
    return ("v6" in kind) or ("v7" in kind)


def _softplus(x):
    # Numerically stable softplus; matches torch.nn.Softplus(beta=1,
    # threshold=20) to f32 precision.  exp/log1p land on the EUP slot.
    return jnp.maximum(x, 0.0) + jnp.log1p(jnp.exp(-jnp.abs(x)))


def _swing_mlp_kernel(x_ref,
                      w0_ref, b0_ref,
                      w1_ref, b1_ref,
                      w2_ref, b2_ref,
                      o_ref, *, use_bf16):
    """Fused 3-layer MLP on one transposed batch tile.

    Shapes are (features, batch): x (d_in, tm), h (d_h, tm), out (d_out, tm).
    Weights are in PyTorch layout (out_features, in_features).
    """
    x = x_ref[...].astype(jnp.float32)          # (d_in, tm)
    d_in = x_ref.shape[0]

    # Layer 0: K = d_in (6 for the 9-bus net) -> unrolled VPU FMAs.
    # x[k:k+1, :] is a row slice (stride-0 sublane broadcast, ~free); the
    # weight-column lane broadcast happens only d_in times per tile.
    if d_in <= _SMALL_K:
        h = b0_ref[...] + w0_ref[:, 0:1] * x[0:1, :]
        for k in range(1, d_in):
            h = h + w0_ref[:, k:k + 1] * x[k:k + 1, :]
    else:
        h = jnp.dot(w0_ref[...], x,
                    preferred_element_type=jnp.float32) + b0_ref[...]
    h = _softplus(h)                            # (d_h0, tm), f32

    mm_dtype = jnp.bfloat16 if use_bf16 else jnp.float32

    # Layer 1: (d_h1, d_h0) @ (d_h0, tm) on the MXU, f32 accumulation.
    h = jnp.dot(w1_ref[...].astype(mm_dtype), h.astype(mm_dtype),
                preferred_element_type=jnp.float32) + b1_ref[...]
    h = _softplus(h)

    # Layer 2: (d_out, d_h1) @ (d_h1, tm) on the MXU.
    h = jnp.dot(w2_ref[...].astype(mm_dtype), h.astype(mm_dtype),
                preferred_element_type=jnp.float32) + b2_ref[...]

    o_ref[...] = h.astype(o_ref.dtype)          # lane-dense (d_out, tm) store


def swing_nn_forward(t, x, params, *, tm=None, use_bf16_matmul=None):
    """Pallas forward pass for SwingNN.forward(t, x) == net(x); `t` is unused.

    x: (batch, d_in).  params: [(w, b), ...] with w in PyTorch layout
    (out_features, in_features).  Returns (batch, d_out).

    If this runs inside an ODE-solver loop, stack solver states / time steps
    into the batch dimension so one pallas_call covers many evaluations
    (launch overhead dominates any in-kernel cost at these sizes).
    """
    del t  # SwingNN ignores t in forward()
    (w0, b0), (w1, b1), (w2, b2) = params
    B, d_in = x.shape
    d_h0 = w0.shape[0]
    d_h1 = w1.shape[0]
    d_out = w2.shape[0]

    if use_bf16_matmul is None:
        use_bf16_matmul = _default_use_bf16()

    # Batch tile (lane axis): one grid step on single-TC chips; split 2-way
    # only when there are 2 TensorCores (v7x) and each core gets >= 128 rows.
    rows = _round_up(max(B, 1), _LANE)
    if tm is None:
        n_tc = _num_tensorcores()
        if n_tc > 1 and rows >= n_tc * _LANE:
            tm = _round_up(pl.cdiv(rows, n_tc), _LANE)
        else:
            tm = rows
        tm = min(tm, _TM_CAP)
    tm = max(_LANE, min(_round_up(tm, _LANE), rows))

    # Ragged batches: pad to a tile multiple, transpose so batch is on lanes.
    Bp = _round_up(B, tm)
    xp = jnp.pad(x, ((0, Bp - B), (0, 0))) if Bp != B else x
    xt = xp.T                                       # (d_in, Bp)

    # Biases as (d, 1) columns so they broadcast over the batch lanes.
    b0c = b0.reshape(d_h0, 1)
    b1c = b1.reshape(d_h1, 1)
    b2c = b2.reshape(d_out, 1)

    resident = lambda i: (0, 0)   # weights/biases resident across batch tiles
    kernel = functools.partial(_swing_mlp_kernel, use_bf16=use_bf16_matmul)

    out_t = pl.pallas_call(
        kernel,
        out_shape=jax.ShapeDtypeStruct((d_out, Bp), x.dtype),
        grid_spec=pltpu.PrefetchScalarGridSpec(
            num_scalar_prefetch=0,
            grid=(Bp // tm,),
            in_specs=[
                pl.BlockSpec((d_in, tm), lambda i: (0, i)),
                pl.BlockSpec((d_h0, d_in), resident),
                pl.BlockSpec((d_h0, 1), resident),
                pl.BlockSpec((d_h1, d_h0), resident),
                pl.BlockSpec((d_h1, 1), resident),
                pl.BlockSpec((d_out, d_h1), resident),
                pl.BlockSpec((d_out, 1), resident),
            ],
            out_specs=pl.BlockSpec((d_out, tm), lambda i: (0, i)),
        ),
        compiler_params=pltpu.CompilerParams(
            dimension_semantics=("parallel",)),
    )(xt, w0, b0c, w1, b1c, w2, b2c)

    out = out_t.T                                   # (Bp, d_out)
    return out if Bp == B else out[:B]


def init_params(key, layers):
    """Deterministic init mimicking torch.nn.Linear (uniform +-1/sqrt(fan_in)).

    Weights are kept in PyTorch layout (out_features, in_features).
    """
    params = []
    for j in range(len(layers) - 1):
        fan_in, fan_out = layers[j], layers[j + 1]
        key, kw, kb = jax.random.split(key, 3)
        bound = 1.0 / jnp.sqrt(fan_in)
        w = jax.random.uniform(kw, (fan_out, fan_in), jnp.float32,
                               minval=-bound, maxval=bound)
        b = jax.random.uniform(kb, (fan_out,), jnp.float32,
                               minval=-bound, maxval=bound)
        params.append((w, b))
    return params


def swing_nn_reference(x, params):
    """Plain-JAX reference (same semantics as the torch nn.Sequential)."""
    h = x
    n = len(params)
    for j, (w, b) in enumerate(params):
        h = h @ w.T + b
        if j < n - 1:
            h = _softplus(h)
    return h


if __name__ == "__main__":
    # SwingNN for the 9-bus swing equations: layers = [input, hidden..., output]
    layers = [6, 32, 32, 6]
    batch = 64

    key = jax.random.PRNGKey(0)
    key, kx = jax.random.split(key)
    x = jax.random.normal(kx, (batch, layers[0]), jnp.float32)
    t = jnp.zeros((batch, 1), jnp.float32)  # ignored, as in SwingNN.forward

    params = init_params(jax.random.PRNGKey(0), layers)
    ref = swing_nn_reference(x, params)

    # f32 MXU path: matches the f32 reference tightly on every generation.
    out = jax.block_until_ready(
        swing_nn_forward(t, x, params, use_bf16_matmul=False))
    assert out.shape == (batch, layers[-1])
    assert jnp.allclose(out, ref, atol=1e-5, rtol=1e-5)

    # Default path (bf16 MXU operands on v6e/v7x, f32 elsewhere): looser check.
    out_auto = jax.block_until_ready(swing_nn_forward(t, x, params))
    assert out_auto.shape == (batch, layers[-1])
    assert jnp.allclose(out_auto, ref, atol=5e-2, rtol=5e-2)

    # Ragged batch exercises the pad + transpose + slice path.
    x_r = jax.random.normal(key, (37, layers[0]), jnp.float32)
    out_r = jax.block_until_ready(
        swing_nn_forward(None, x_r, params, use_bf16_matmul=False))
    assert out_r.shape == (37, layers[-1])
    assert jnp.allclose(out_r, swing_nn_reference(x_r, params),
                        atol=1e-5, rtol=1e-5)

    print("KERNEL_OK")
</pallas_src>

<mosaic_0001>
module attributes {stable_mosaic.version = 11 : i64} {
  func.func @_swing_mlp_kernel(%arg0: i32, %arg1: memref<6x128xf32, #tpu.memory_space<vmem>>, %arg2: memref<32x6xf32, #tpu.memory_space<vmem>>, %arg3: memref<32x1xf32, #tpu.memory_space<vmem>>, %arg4: memref<32x32xf32, #tpu.memory_space<vmem>>, %arg5: memref<32x1xf32, #tpu.memory_space<vmem>>, %arg6: memref<6x32xf32, #tpu.memory_space<vmem>>, %arg7: memref<6x1xf32, #tpu.memory_space<vmem>>, %arg8: memref<6x128xf32, #tpu.memory_space<vmem>>) attributes {dimension_semantics = [#tpu.dimension_semantics<parallel>], iteration_bounds = array<i64: 1>, scalar_prefetch = 0 : i64, scratch_operands = 0 : i64, tpu.core_type = #tpu.core_type<tc>, window_params = [{transform_indices = @transform_0, window_bounds = array<i64: 6, 128>}, {pipeline_mode = #tpu.pipeline_mode<synchronous>, transform_indices = @transform_1, window_bounds = array<i64: 32, 6>}, {pipeline_mode = #tpu.pipeline_mode<synchronous>, transform_indices = @transform_2, window_bounds = array<i64: 32, 1>}, {pipeline_mode = #tpu.pipeline_mode<synchronous>, transform_indices = @transform_3, window_bounds = array<i64: 32, 32>}, {pipeline_mode = #tpu.pipeline_mode<synchronous>, transform_indices = @transform_4, window_bounds = array<i64: 32, 1>}, {pipeline_mode = #tpu.pipeline_mode<synchronous>, transform_indices = @transform_5, window_bounds = array<i64: 6, 32>}, {pipeline_mode = #tpu.pipeline_mode<synchronous>, transform_indices = @transform_6, window_bounds = array<i64: 6, 1>}, {transform_indices = @transform_7, window_bounds = array<i64: 6, 128>}]} {
    %c0 = arith.constant 0 : index
    %c0_0 = arith.constant 0 : index
    %0 = vector.load %arg1[%c0, %c0_0] : memref<6x128xf32, #tpu.memory_space<vmem>>, vector<6x128xf32>
    %c0_1 = arith.constant 0 : index
    %c0_2 = arith.constant 0 : index
    %1 = vector.load %arg3[%c0_1, %c0_2] : memref<32x1xf32, #tpu.memory_space<vmem>>, vector<32x1xf32>
    %c0_3 = arith.constant 0 : index
    %c0_4 = arith.constant 0 : index
    %2 = vector.load %arg2[%c0_3, %c0_4] : memref<32x6xf32, #tpu.memory_space<vmem>>, vector<32x1xf32>
    %3 = vector.extract_strided_slice %0 {offsets = [0, 0], sizes = [1, 128], strides = [1, 1]} : vector<6x128xf32> to vector<1x128xf32>
    %4 = vector.broadcast %2 : vector<32x1xf32> to vector<32x128xf32>
    %5 = vector.broadcast %3 : vector<1x128xf32> to vector<32x128xf32>
    %6 = arith.mulf %4, %5 : vector<32x128xf32>
    %7 = vector.broadcast %1 : vector<32x1xf32> to vector<32x128xf32>
    %8 = arith.addf %7, %6 : vector<32x128xf32>
    %c0_5 = arith.constant 0 : index
    %c1 = arith.constant 1 : index
    %9 = vector.load %arg2[%c0_5, %c1] : memref<32x6xf32, #tpu.memory_space<vmem>>, vector<32x1xf32>
    %10 = vector.extract_strided_slice %0 {offsets = [1, 0], sizes = [1, 128], strides = [1, 1]} : vector<6x128xf32> to vector<1x128xf32>
    %11 = vector.broadcast %9 : vector<32x1xf32> to vector<32x128xf32>
    %12 = vector.broadcast %10 : vector<1x128xf32> to vector<32x128xf32>
    %13 = arith.mulf %11, %12 : vector<32x128xf32>
    %14 = arith.addf %8, %13 : vector<32x128xf32>
    %c0_6 = arith.constant 0 : index
    %c2 = arith.constant 2 : index
    %15 = vector.load %arg2[%c0_6, %c2] : memref<32x6xf32, #tpu.memory_space<vmem>>, vector<32x1xf32>
    %16 = vector.extract_strided_slice %0 {offsets = [2, 0], sizes = [1, 128], strides = [1, 1]} : vector<6x128xf32> to vector<1x128xf32>
    %17 = vector.broadcast %15 : vector<32x1xf32> to vector<32x128xf32>
    %18 = vector.broadcast %16 : vector<1x128xf32> to vector<32x128xf32>
    %19 = arith.mulf %17, %18 : vector<32x128xf32>
    %20 = arith.addf %14, %19 : vector<32x128xf32>
    %c0_7 = arith.constant 0 : index
    %c3 = arith.constant 3 : index
    %21 = vector.load %arg2[%c0_7, %c3] : memref<32x6xf32, #tpu.memory_space<vmem>>, vector<32x1xf32>
    %22 = vector.extract_strided_slice %0 {offsets = [3, 0], sizes = [1, 128], strides = [1, 1]} : vector<6x128xf32> to vector<1x128xf32>
    %23 = vector.broadcast %21 : vector<32x1xf32> to vector<32x128xf32>
    %24 = vector.broadcast %22 : vector<1x128xf32> to vector<32x128xf32>
    %25 = arith.mulf %23, %24 : vector<32x128xf32>
    %26 = arith.addf %20, %25 : vector<32x128xf32>
    %c0_8 = arith.constant 0 : index
    %c4 = arith.constant 4 : index
    %27 = vector.load %arg2[%c0_8, %c4] : memref<32x6xf32, #tpu.memory_space<vmem>>, vector<32x1xf32>
    %28 = vector.extract_strided_slice %0 {offsets = [4, 0], sizes = [1, 128], strides = [1, 1]} : vector<6x128xf32> to vector<1x128xf32>
    %29 = vector.broadcast %27 : vector<32x1xf32> to vector<32x128xf32>
    %30 = vector.broadcast %28 : vector<1x128xf32> to vector<32x128xf32>
    %31 = arith.mulf %29, %30 : vector<32x128xf32>
    %32 = arith.addf %26, %31 : vector<32x128xf32>
    %c0_9 = arith.constant 0 : index
    %c5 = arith.constant 5 : index
    %33 = vector.load %arg2[%c0_9, %c5] : memref<32x6xf32, #tpu.memory_space<vmem>>, vector<32x1xf32>
    %34 = vector.extract_strided_slice %0 {offsets = [5, 0], sizes = [1, 128], strides = [1, 1]} : vector<6x128xf32> to vector<1x128xf32>
    %35 = vector.broadcast %33 : vector<32x1xf32> to vector<32x128xf32>
    %36 = vector.broadcast %34 : vector<1x128xf32> to vector<32x128xf32>
    %37 = arith.mulf %35, %36 : vector<32x128xf32>
    %38 = arith.addf %32, %37 : vector<32x128xf32>
    %cst = arith.constant 0.000000e+00 : f32
    %39 = vector.broadcast %cst : f32 to vector<32x128xf32>
    %40 = arith.maximumf %38, %39 : vector<32x128xf32>
    %41 = math.absf %38 : vector<32x128xf32>
    %cst_10 = arith.constant 0.000000e+00 : f32
    %42 = vector.broadcast %cst_10 : f32 to vector<32x128xf32>
    %43 = arith.subf %42, %41 : vector<32x128xf32>
    %44 = math.exp %43 : vector<32x128xf32>
    %45 = math.log1p %44 : vector<32x128xf32>
    %46 = arith.addf %40, %45 : vector<32x128xf32>
    %c0_11 = arith.constant 0 : index
    %c0_12 = arith.constant 0 : index
    %47 = vector.load %arg4[%c0_11, %c0_12] : memref<32x32xf32, #tpu.memory_space<vmem>>, vector<32x32xf32>
    %cst_13 = arith.constant dense<0.000000e+00> : vector<32x128xf32>
    %48 = tpu.matmul %47, %46, %cst_13 {dimension_numbers = #tpu.dot_dimension_numbers<[1], [0], [0], [1], [0, 0, 1, 1], [], []>} : vector<32x32xf32>, vector<32x128xf32>, vector<32x128xf32> -> vector<32x128xf32>
    %c0_14 = arith.constant 0 : index
    %c0_15 = arith.constant 0 : index
    %49 = vector.load %arg5[%c0_14, %c0_15] : memref<32x1xf32, #tpu.memory_space<vmem>>, vector<32x1xf32>
    %50 = vector.broadcast %49 : vector<32x1xf32> to vector<32x128xf32>
    %51 = arith.addf %48, %50 : vector<32x128xf32>
    %cst_16 = arith.constant 0.000000e+00 : f32
    %52 = vector.broadcast %cst_16 : f32 to vector<32x128xf32>
    %53 = arith.maximumf %51, %52 : vector<32x128xf32>
    %54 = math.absf %51 : vector<32x128xf32>
    %cst_17 = arith.constant 0.000000e+00 : f32
    %55 = vector.broadcast %cst_17 : f32 to vector<32x128xf32>
    %56 = arith.subf %55, %54 : vector<32x128xf32>
    %57 = math.exp %56 : vector<32x128xf32>
    %58 = math.log1p %57 : vector<32x128xf32>
    %59 = arith.addf %53, %58 : vector<32x128xf32>
    %c0_18 = arith.constant 0 : index
    %c0_19 = arith.constant 0 : index
    %60 = vector.load %arg6[%c0_18, %c0_19] : memref<6x32xf32, #tpu.memory_space<vmem>>, vector<6x32xf32>
    %cst_20 = arith.constant dense<0.000000e+00> : vector<6x128xf32>
    %61 = tpu.matmul %60, %59, %cst_20 {dimension_numbers = #tpu.dot_dimension_numbers<[1], [0], [0], [1], [0, 0, 1, 1], [], []>} : vector<6x32xf32>, vector<32x128xf32>, vector<6x128xf32> -> vector<6x128xf32>
    %c0_21 = arith.constant 0 : index
    %c0_22 = arith.constant 0 : index
    %62 = vector.load %arg7[%c0_21, %c0_22] : memref<6x1xf32, #tpu.memory_space<vmem>>, vector<6x1xf32>
    %63 = vector.broadcast %62 : vector<6x1xf32> to vector<6x128xf32>
    %64 = arith.addf %61, %63 : vector<6x128xf32>
    %c0_23 = arith.constant 0 : index
    %c0_24 = arith.constant 0 : index
    %65 = vector.load %arg8[%c0_23, %c0_24] : memref<6x128xf32, #tpu.memory_space<vmem>>, vector<6x128xf32>
    tpu.vector_store %arg8[%c0_23, %c0_24], %64 {strides = array<i32>} : memref<6x128xf32, #tpu.memory_space<vmem>>, vector<6x128xf32>,
    return
  }
  func.func @transform_0(%arg0: i32) -> (i32, i32) {
    %c0_i32 = arith.constant 0 : i32
    %c0_i32_0 = arith.constant 0 : i32
    return %c0_i32, %arg0 : i32, i32
  }
  func.func @transform_1(%arg0: i32) -> (i32, i32) {
    %c0_i32 = arith.constant 0 : i32
    %c0_i32_0 = arith.constant 0 : i32
    %c0_i32_1 = arith.constant 0 : i32
    return %c0_i32, %c0_i32_0 : i32, i32
  }
  func.func @transform_2(%arg0: i32) -> (i32, i32) {
    %c0_i32 = arith.constant 0 : i32
    %c0_i32_0 = arith.constant 0 : i32
    %c0_i32_1 = arith.constant 0 : i32
    return %c0_i32, %c0_i32_0 : i32, i32
  }
  func.func @transform_3(%arg0: i32) -> (i32, i32) {
    %c0_i32 = arith.constant 0 : i32
    %c0_i32_0 = arith.constant 0 : i32
    %c0_i32_1 = arith.constant 0 : i32
    return %c0_i32, %c0_i32_0 : i32, i32
  }
  func.func @transform_4(%arg0: i32) -> (i32, i32) {
    %c0_i32 = arith.constant 0 : i32
    %c0_i32_0 = arith.constant 0 : i32
    %c0_i32_1 = arith.constant 0 : i32
    return %c0_i32, %c0_i32_0 : i32, i32
  }
  func.func @transform_5(%arg0: i32) -> (i32, i32) {
    %c0_i32 = arith.constant 0 : i32
    %c0_i32_0 = arith.constant 0 : i32
    %c0_i32_1 = arith.constant 0 : i32
    return %c0_i32, %c0_i32_0 : i32, i32
  }
  func.func @transform_6(%arg0: i32) -> (i32, i32) {
    %c0_i32 = arith.constant 0 : i32
    %c0_i32_0 = arith.constant 0 : i32
    %c0_i32_1 = arith.constant 0 : i32
    return %c0_i32, %c0_i32_0 : i32, i32
  }
  func.func @transform_7(%arg0: i32) -> (i32, i32) {
    %c0_i32 = arith.constant 0 : i32
    %c0_i32_0 = arith.constant 0 : i32
    return %c0_i32, %arg0 : i32, i32
  }
}

</mosaic_0001>

<llo_original>
// kernel: tpu_custom_call.1
$region0: #{tpu_custom_call.1}
  #allocation0 [shape = 'u32[]', space=smem, size = 0x4, offset = 0x4, fixed_abs, tag = 'smem constant byte address 0x4 - core index']
  #allocation1 [shape = 'u32[144,128]{1,0:T(1,128)}', space=vmem, size = 0x12000, scoped, tag = 'internal scratch']
  %s0 = inlined_call_operand.vmem [shape: f32[6,128], index: 0, kind: input, shape index: {}]
  %s1 = inlined_call_operand.vmem [shape: f32[32,6], index: 1, kind: input, shape index: {}]
  %s2 = inlined_call_operand.vmem [shape: f32[32,1], index: 2, kind: input, shape index: {}]
  %s3 = inlined_call_operand.vmem [shape: f32[32,32], index: 3, kind: input, shape index: {}]
  %s4 = inlined_call_operand.vmem [shape: f32[32,1], index: 4, kind: input, shape index: {}]
  %s5 = inlined_call_operand.vmem [shape: f32[6,32], index: 5, kind: input, shape index: {}]
  %s6 = inlined_call_operand.vmem [shape: f32[6,1], index: 6, kind: input, shape index: {}]
  %s7 = inlined_call_operand.hbm [shape: f32[6,128], index: 7, kind: output, shape index: {}]
  %s8 = sld [smem:[#allocation0]]
  $region38: #{tpu_custom_call.1} parent=0
    _
  %s10 = ssub.s32 1, %s8
  %s11 = scalar_select 0, %s10, %s8
  $region1: #{tpu_custom_call.1} parent=0
    #allocation2 [shape = 'u8[4096]{0}', space=vmem, size = 0x1000, scoped, tag = 'output window, operand 0, single buffered']
    #allocation3 [shape = 's32[1]{0}', space=sflag, size = 0x4, scoped, tag = 'scoped memory for tpu_custom_call.1']
    %12 = vsyncpa [#allocation3], 0
    // Predicated region
    $region2: #{tpu_custom_call.1} parent=1 // pred_check
      _
    $region3: #{tpu_custom_call.1} parent=1 // pred_check_branch
      %14 = sbr.rel (0) target = $region5
    $region4: #{tpu_custom_call.1} parent=1 // pred_region
      _
    $region5: #{tpu_custom_call.1} parent=1 // pred_fallthru
      _
    // Predicated region
    $region6: #{tpu_custom_call.1} parent=1 // pred_check
      _
    $region7: #{tpu_custom_call.1} parent=1 // pred_check_branch
      %16 = sbr.rel (0) target = $region9
    $region8: #{tpu_custom_call.1} parent=1 // pred_region
      _
    $region9: #{tpu_custom_call.1} parent=1 // pred_fallthru
      _
    // Predicated region
    $region10: #{tpu_custom_call.1} parent=1 // pred_check
      _
    $region11: #{tpu_custom_call.1} parent=1 // pred_check_branch
      %18 = sbr.rel (0) target = $region13
    $region12: #{tpu_custom_call.1} parent=1 // pred_region
      _
    $region13: #{tpu_custom_call.1} parent=1 // pred_fallthru
      _
    // Predicated region
    $region14: #{tpu_custom_call.1} parent=1 // pred_check
      _
    $region15: #{tpu_custom_call.1} parent=1 // pred_check_branch
      %20 = sbr.rel (0) target = $region17
    $region16: #{tpu_custom_call.1} parent=1 // pred_region
      _
    $region17: #{tpu_custom_call.1} parent=1 // pred_fallthru
      _
    // Predicated region
    $region18: #{tpu_custom_call.1} parent=1 // pred_check
      _
    $region19: #{tpu_custom_call.1} parent=1 // pred_check_branch
      %22 = sbr.rel (0) target = $region21
    $region20: #{tpu_custom_call.1} parent=1 // pred_region
      _
    $region21: #{tpu_custom_call.1} parent=1 // pred_fallthru
      _
    // Predicated region
    $region22: #{tpu_custom_call.1} parent=1 // pred_check
      _
    $region23: #{tpu_custom_call.1} parent=1 // pred_check_branch
      %24 = sbr.rel (0) target = $region25
    $region24: #{tpu_custom_call.1} parent=1 // pred_region
      _
    $region25: #{tpu_custom_call.1} parent=1 // pred_fallthru
      _
    // Predicated region
    $region26: #{tpu_custom_call.1} parent=1 // pred_check
      _
    $region27: #{tpu_custom_call.1} parent=1 // pred_check_branch
      %26 = sbr.rel (0) target = $region29
    $region28: #{tpu_custom_call.1} parent=1 // pred_region
      _
    $region29: #{tpu_custom_call.1} parent=1 // pred_fallthru
      _
    %v27 = vld [vmem:[%s0] sm:$0x3f]
    %v28 = vld [vmem:[%s2] sm:$0xff]
    %v29 = vld [vmem:[%s2 + $0x8] sm:$0xff]
    %v30 = vld [vmem:[%s2 + $0x10] sm:$0xff]
    %v31 = vld [vmem:[%s2 + $0x18] sm:$0xff]
    %v32 = vld [vmem:[%s1] sm:$0xff]
    %v33 = vld [vmem:[%s1 + $0x8] sm:$0xff]
    %v34 = vld [vmem:[%s1 + $0x10] sm:$0xff]
    %v35 = vld [vmem:[%s1 + $0x18] sm:$0xff]
    %37 = vset.pattern.permute.xlu0 0
    %38 = vperm.xlu0 %37, %v32
    %v39 = vpop.permute.xlu0 %38
    %42 = vset.pattern.permute.xlu0 0
    %43 = vperm.xlu0 %42, %v33
    %v44 = vpop.permute.xlu0 %43
    %47 = vset.pattern.permute.xlu0 0
    %48 = vperm.xlu0 %47, %v34
    %v49 = vpop.permute.xlu0 %48
    %52 = vset.pattern.permute.xlu0 0
    %53 = vperm.xlu0 %52, %v35
    %v54 = vpop.permute.xlu0 %53
    %v56 = vlaneseq
    %v57 = vshrl.u32 %v56, 7
    %v58 = vsub.s32 0, %v57
    %v59 = vrot.slane %v27, %v58
    %v60 = vmul.f32 %v39, %v59
    %v61 = vmul.f32 %v44, %v59
    %v62 = vmul.f32 %v49, %v59
    %v63 = vmul.f32 %v54, %v59
    %65 = vset.pattern.permute.xlu0 0
    %66 = vperm.xlu0 %65, %v28
    %v67 = vpop.permute.xlu0 %66
    %70 = vset.pattern.permute.xlu0 0
    %71 = vperm.xlu0 %70, %v29
    %v72 = vpop.permute.xlu0 %71
    %75 = vset.pattern.permute.xlu0 0
    %76 = vperm.xlu0 %75, %v30
    %v77 = vpop.permute.xlu0 %76
    %80 = vset.pattern.permute.xlu0 0
    %81 = vperm.xlu0 %80, %v31
    %v82 = vpop.permute.xlu0 %81
    %v84 = vadd.f32 %v67, %v60
    %v85 = vadd.f32 %v72, %v61
    %v86 = vadd.f32 %v77, %v62
    %v87 = vadd.f32 %v82, %v63
    %88 = vset.pattern.permute.xlu0 1
    %89 = vperm.xlu0 %88, %v32
    %v90 = vpop.permute.xlu0 %89
    %92 = vset.pattern.permute.xlu0 1
    %93 = vperm.xlu0 %92, %v33
    %v94 = vpop.permute.xlu0 %93
    %96 = vset.pattern.permute.xlu0 1
    %97 = vperm.xlu0 %96, %v34
    %v98 = vpop.permute.xlu0 %97
    %100 = vset.pattern.permute.xlu0 1
    %101 = vperm.xlu0 %100, %v35
    %v102 = vpop.permute.xlu0 %101
    %v104 = vlaneseq
    %v105 = vshrl.u32 %v104, 7
    %v106 = vsub.s32 1, %v105
    %v107 = vrot.slane %v27, %v106
    %v108 = vmul.f32 %v90, %v107
    %v109 = vmul.f32 %v94, %v107
    %v110 = vmul.f32 %v98, %v107
    %v111 = vmul.f32 %v102, %v107
    %v112 = vadd.f32 %v84, %v108
    %v113 = vadd.f32 %v85, %v109
    %v114 = vadd.f32 %v86, %v110
    %v115 = vadd.f32 %v87, %v111
    %116 = vset.pattern.permute.xlu0 2
    %117 = vperm.xlu0 %116, %v32
    %v118 = vpop.permute.xlu0 %117
    %120 = vset.pattern.permute.xlu0 2
    %121 = vperm.xlu0 %120, %v33
    %v122 = vpop.permute.xlu0 %121
    %124 = vset.pattern.permute.xlu0 2
    %125 = vperm.xlu0 %124, %v34
    %v126 = vpop.permute.xlu0 %125
    %128 = vset.pattern.permute.xlu0 2
    %129 = vperm.xlu0 %128, %v35
    %v130 = vpop.permute.xlu0 %129
    %v132 = vlaneseq
    %v133 = vshrl.u32 %v132, 7
    %v134 = vsub.s32 2, %v133
    %v135 = vrot.slane %v27, %v134
    %v136 = vmul.f32 %v118, %v135
    %v137 = vmul.f32 %v122, %v135
    %v138 = vmul.f32 %v126, %v135
    %v139 = vmul.f32 %v130, %v135
    %v140 = vadd.f32 %v112, %v136
    %v141 = vadd.f32 %v113, %v137
    %v142 = vadd.f32 %v114, %v138
    %v143 = vadd.f32 %v115, %v139
    %144 = vset.pattern.permute.xlu0 3
    %145 = vperm.xlu0 %144, %v32
    %v146 = vpop.permute.xlu0 %145
    %148 = vset.pattern.permute.xlu0 3
    %149 = vperm.xlu0 %148, %v33
    %v150 = vpop.permute.xlu0 %149
    %152 = vset.pattern.permute.xlu0 3
    %153 = vperm.xlu0 %152, %v34
    %v154 = vpop.permute.xlu0 %153
    %156 = vset.pattern.permute.xlu0 3
    %157 = vperm.xlu0 %156, %v35
    %v158 = vpop.permute.xlu0 %157
    %v160 = vlaneseq
    %v161 = vshrl.u32 %v160, 7
    %v162 = vsub.s32 3, %v161
    %v163 = vrot.slane %v27, %v162
    %v164 = vmul.f32 %v146, %v163
    %v165 = vmul.f32 %v150, %v163
    %v166 = vmul.f32 %v154, %v163
    %v167 = vmul.f32 %v158, %v163
    %v168 = vadd.f32 %v140, %v164
    %v169 = vadd.f32 %v141, %v165
    %v170 = vadd.f32 %v142, %v166
    %v171 = vadd.f32 %v143, %v167
    %172 = vset.pattern.permute.xlu0 4
    %173 = vperm.xlu0 %172, %v32
    %v174 = vpop.permute.xlu0 %173
    %176 = vset.pattern.permute.xlu0 4
    %177 = vperm.xlu0 %176, %v33
    %v178 = vpop.permute.xlu0 %177
    %180 = vset.pattern.permute.xlu0 4
    %181 = vperm.xlu0 %180, %v34
    %v182 = vpop.permute.xlu0 %181
    %184 = vset.pattern.permute.xlu0 4
    %185 = vperm.xlu0 %184, %v35
    %v186 = vpop.permute.xlu0 %185
    %v188 = vlaneseq
    %v189 = vshrl.u32 %v188, 7
    %v190 = vsub.s32 4, %v189
    %v191 = vrot.slane %v27, %v190
    %v192 = vmul.f32 %v174, %v191
    %v193 = vmul.f32 %v178, %v191
    %v194 = vmul.f32 %v182, %v191
    %v195 = vmul.f32 %v186, %v191
    %v196 = vadd.f32 %v168, %v192
    %v197 = vadd.f32 %v169, %v193
    %v198 = vadd.f32 %v170, %v194
    %v199 = vadd.f32 %v171, %v195
    %200 = vset.pattern.permute.xlu0 5
    %201 = vperm.xlu0 %200, %v32
    %v202 = vpop.permute.xlu0 %201
    %204 = vset.pattern.permute.xlu0 5
    %205 = vperm.xlu0 %204, %v33
    %v206 = vpop.permute.xlu0 %205
    %208 = vset.pattern.permute.xlu0 5
    %209 = vperm.xlu0 %208, %v34
    %v210 = vpop.permute.xlu0 %209
    %212 = vset.pattern.permute.xlu0 5
    %213 = vperm.xlu0 %212, %v35
    %v214 = vpop.permute.xlu0 %213
    %v216 = vlaneseq
    %v217 = vshrl.u32 %v216, 7
    %v218 = vsub.s32 5, %v217
    %v219 = vrot.slane %v27, %v218
    %v220 = vmul.f32 %v202, %v219
    %v221 = vmul.f32 %v206, %v219
    %v222 = vmul.f32 %v210, %v219
    %v223 = vmul.f32 %v214, %v219
    %v224 = vadd.f32 %v196, %v220
    %v225 = vadd.f32 %v197, %v221
    %v226 = vadd.f32 %v198, %v222
    %v227 = vadd.f32 %v199, %v223
    %v228 = vmax.f32 %v224, 0.0
    %v229 = vmax.f32 %v225, 0.0
    %v230 = vmax.f32 %v226, 0.0
    %v231 = vmax.f32 %v227, 0.0
    %v232 = vand.u32 2147483647, %v224
    %v233 = vand.u32 2147483647, %v225
    %v234 = vand.u32 2147483647, %v226
    %v235 = vand.u32 2147483647, %v227
    %v236 = vsub.f32 0.0, %v232
    %v237 = vsub.f32 0.0, %v233
    %v238 = vsub.f32 0.0, %v234
    %v239 = vsub.f32 0.0, %v235
    %v240 = vmul.f32 %v236, 1.442695
    %v241 = vpow.pop %v240
    %v242 = vmul.f32 %v237, 1.442695
    %v243 = vpow.pop %v242
    %v244 = vmul.f32 %v238, 1.442695
    %v245 = vpow.pop %v244
    %v246 = vmul.f32 %v239, 1.442695
    %v247 = vpow.pop %v246
    %v248 = vadd.f32 %v241, 1.0
    %v249 = vlog2.pop %v248
    %v250 = vmul.f32 %v249, 0.6931472
    %v251 = vmul.f32 -0.5, %v241
    %v252 = vadd.f32 %v251, 1.0
    %v253 = vmul.f32 %v252, %v241
    %v254 = vand.u32 2147483647, %v241
    %vm255 = vcmp.lt.f32.partialorder %v254, 0.0004427343
    %v256 = vsel %vm255, %v253, %v250
    %v257 = vadd.f32 %v243, 1.0
    %v258 = vlog2.pop %v257
    %v259 = vmul.f32 %v258, 0.6931472
    %v260 = vmul.f32 -0.5, %v243
    %v261 = vadd.f32 %v260, 1.0
    %v262 = vmul.f32 %v261, %v243
    %v263 = vand.u32 2147483647, %v243
    %vm264 = vcmp.lt.f32.partialorder %v263, 0.0004427343
    %v265 = vsel %vm264, %v262, %v259
    %v266 = vadd.f32 %v245, 1.0
    %v267 = vlog2.pop %v266
    %v268 = vmul.f32 %v267, 0.6931472
    %v269 = vmul.f32 -0.5, %v245
    %v270 = vadd.f32 %v269, 1.0
    %v271 = vmul.f32 %v270, %v245
    %v272 = vand.u32 2147483647, %v245
    %vm273 = vcmp.lt.f32.partialorder %v272, 0.0004427343
    %v274 = vsel %vm273, %v271, %v268
    %v275 = vadd.f32 %v247, 1.0
    %v276 = vlog2.pop %v275
    %v277 = vmul.f32 %v276, 0.6931472
    %v278 = vmul.f32 -0.5, %v247
    %v279 = vadd.f32 %v278, 1.0
    %v280 = vmul.f32 %v279, %v247
    %v281 = vand.u32 2147483647, %v247
    %vm282 = vcmp.lt.f32.partialorder %v281, 0.0004427343
    %v283 = vsel %vm282, %v280, %v277
    %v284 = vadd.f32 %v228, %v256
    %v285 = vadd.f32 %v229, %v265
    %v286 = vadd.f32 %v230, %v274
    %v287 = vadd.f32 %v231, %v283
    %v288 = vld [vmem:[%s3] sm:$0xff]
    %v289 = vld [vmem:[%s3 + $0x8] sm:$0xff]
    %v290 = vld [vmem:[%s3 + $0x10] sm:$0xff]
    %v291 = vld [vmem:[%s3 + $0x18] sm:$0xff]
    %v292 = vld [vmem:[%s4] sm:$0xff]
    %v293 = vld [vmem:[%s4 + $0x8] sm:$0xff]
    %v294 = vld [vmem:[%s4 + $0x10] sm:$0xff]
    %v295 = vld [vmem:[%s4 + $0x18] sm:$0xff]
    %297 = vset.pattern.permute.xlu0 0
    %298 = vperm.xlu0 %297, %v292
    %v299 = vpop.permute.xlu0 %298
    %302 = vset.pattern.permute.xlu0 0
    %303 = vperm.xlu0 %302, %v293
    %v304 = vpop.permute.xlu0 %303
    %307 = vset.pattern.permute.xlu0 0
    %308 = vperm.xlu0 %307, %v294
    %v309 = vpop.permute.xlu0 %308
    %312 = vset.pattern.permute.xlu0 0
    %313 = vperm.xlu0 %312, %v295
    %v314 = vpop.permute.xlu0 %313
    %vm316 = vcmask 261120
    %v318 = vsel %vm316, %v288, 0
    %v321 = vsel %vm316, %v289, 0
    %v324 = vsel %vm316, %v290, 0
    %v327 = vsel %vm316, %v291, 0
    %329 = vmatprep.subr.mxu0 0.0
    %330 = vmatpush1.msra.mxu0 %v284
    %331 = vmatprep.subr.mxu0 0.0
    %332 = vmatpush1.msra.mxu0 %v285
    %333 = vmatprep.subr.mxu0 0.0
    %334 = vmatpush1.msra.mxu0 %v286
    %335 = vmatprep.subr.mxu0 0.0
    %336 = vmatpush1.msra.mxu0 %v287
    %337 = vmatprep.subr.mxu0 0.0
    %338 = vmatpush1.msra.mxu0 0.0
    %339 = vmatprep.subr.mxu0 0.0
    %340 = vmatpush1.msra.mxu0 0.0
    %341 = vmatprep.subr.mxu0 0.0
    %342 = vmatpush1.msra.mxu0 0.0
    %343 = vmatprep.subr.mxu0 0.0
    %344 = vmatpush1.msra.mxu0 0.0
    %345 = vmatprep.subr.mxu0 0.0
    %346 = vmatpush1.msra.mxu0 0.0
    %347 = vmatprep.subr.mxu0 0.0
    %348 = vmatpush1.msra.mxu0 0.0
    %349 = vmatprep.subr.mxu0 0.0
    %350 = vmatpush1.msra.mxu0 0.0
    %351 = vmatprep.subr.mxu0 0.0
    %352 = vmatpush1.msra.mxu0 0.0
    %353 = vmatprep.subr.mxu0 0.0
    %354 = vmatpush1.msra.mxu0 0.0
    %355 = vmatprep.subr.mxu0 0.0
    %356 = vmatpush1.msra.mxu0 0.0
    %357 = vmatprep.subr.mxu0 0.0
    %358 = vmatpush1.msra.mxu0 0.0
    %359 = vmatprep.subr.mxu0 0.0
    %360 = vmatpush1.msra.mxu0 0.0
    %361 = vmatprep.subr.mxu0 0.0
    %362 = vmatpush1.msra.mxu0 0.0
    %363 = vmatprep.subr.mxu0 0.0
    %364 = vmatpush1.msra.mxu0 0.0
    %365 = vmatprep.subr.mxu0 0.0
    %366 = vmatpush1.msra.mxu0 0.0
    %367 = vmatprep.subr.mxu0 0.0
    %368 = vmatpush1.msra.mxu0 0.0
    %369 = vmatprep.subr.mxu0 0.0
    %370 = vmatpush1.msra.mxu0 0.0
    %371 = vmatprep.subr.mxu0 0.0
    %372 = vmatpush1.msra.mxu0 0.0
    %373 = vmatprep.subr.mxu0 0.0
    %374 = vmatpush1.msra.mxu0 0.0
    %375 = vmatprep.subr.mxu0 0.0
    %376 = vmatpush1.msra.mxu0 0.0
    %377 = vmatprep.subr.mxu0 0.0
    %378 = vmatpush1.msra.mxu0 0.0
    %379 = vmatprep.subr.mxu0 0.0
    %380 = vmatpush1.msra.mxu0 0.0
    %381 = vmatprep.subr.mxu0 0.0
    %382 = vmatpush1.msra.mxu0 0.0
    %383 = vmatprep.subr.mxu0 0.0
    %384 = vmatpush1.msra.mxu0 0.0
    %385 = vmatprep.subr.mxu0 0.0
    %386 = vmatpush1.msra.mxu0 0.0
    %387 = vmatprep.subr.mxu0 0.0
    %388 = vmatpush1.msra.mxu0 0.0
    %389 = vmatprep.subr.mxu0 0.0
    %390 = vmatpush1.msra.mxu0 0.0
    %391 = vmatprep.subr.mxu0 0.0
    %392 = vmatpush1.msra.mxu0 0.0
    %393 = vmatprep.mubr.f32.mxu0 0.0
    %394 = vmatmul.mubr.f32.gmra.mrb[0].mxu0 %v318
    %v395 = vpop.f32.mrb[0].mxu0
    %v396 = vadd.f32 %v299, %v395
    %v397 = vpop.f32.mrb[0].mxu0
    %398 = vmatprep.mubr.f32.mxu0 0.0
    %399 = vmatmul.mubr.f32.gmra.mrb[0].mxu0 %v321
    %v400 = vpop.f32.mrb[0].mxu0
    %v401 = vadd.f32 %v304, %v400
    %v402 = vpop.f32.mrb[0].mxu0
    %403 = vmatprep.mubr.f32.mxu0 0.0
    %404 = vmatmul.mubr.f32.gmra.mrb[0].mxu0 %v324
    %v405 = vpop.f32.mrb[0].mxu0
    %v406 = vadd.f32 %v309, %v405
    %v407 = vpop.f32.mrb[0].mxu0
    %408 = vmatprep.mubr.f32.mxu0 0.0
    %409 = vmatmul.mubr.f32.gmra.mrb[0].mxu0 %v327
    %v410 = vpop.f32.mrb[0].mxu0
    %v411 = vadd.f32 %v314, %v410
    %v412 = vpop.f32.mrb[0].mxu0
    %413 = vdwg.mxu0
    %v414 = vmax.f32 %v396, 0.0
    %v415 = vmax.f32 %v401, 0.0
    %v416 = vmax.f32 %v406, 0.0
    %v417 = vmax.f32 %v411, 0.0
    %v418 = vand.u32 2147483647, %v396
    %v419 = vand.u32 2147483647, %v401
    %v420 = vand.u32 2147483647, %v406
    %v421 = vand.u32 2147483647, %v411
    %v422 = vsub.f32 0.0, %v418
    %v423 = vsub.f32 0.0, %v419
    %v424 = vsub.f32 0.0, %v420
    %v425 = vsub.f32 0.0, %v421
    %v426 = vmul.f32 %v422, 1.442695
    %v427 = vpow.pop %v426
    %v428 = vmul.f32 %v423, 1.442695
    %v429 = vpow.pop %v428
    %v430 = vmul.f32 %v424, 1.442695
    %v431 = vpow.pop %v430
    %v432 = vmul.f32 %v425, 1.442695
    %v433 = vpow.pop %v432
    %v434 = vadd.f32 %v427, 1.0
    %v435 = vlog2.pop %v434
    %v436 = vmul.f32 %v435, 0.6931472
    %v437 = vmul.f32 -0.5, %v427
    %v438 = vadd.f32 %v437, 1.0
    %v439 = vmul.f32 %v438, %v427
    %v440 = vand.u32 2147483647, %v427
    %vm441 = vcmp.lt.f32.partialorder %v440, 0.0004427343
    %v442 = vsel %vm441, %v439, %v436
    %v443 = vadd.f32 %v429, 1.0
    %v444 = vlog2.pop %v443
    %v445 = vmul.f32 %v444, 0.6931472
    %v446 = vmul.f32 -0.5, %v429
    %v447 = vadd.f32 %v446, 1.0
    %v448 = vmul.f32 %v447, %v429
    %v449 = vand.u32 2147483647, %v429
    %vm450 = vcmp.lt.f32.partialorder %v449, 0.0004427343
    %v451 = vsel %vm450, %v448, %v445
    %v452 = vadd.f32 %v431, 1.0
    %v453 = vlog2.pop %v452
    %v454 = vmul.f32 %v453, 0.6931472
    %v455 = vmul.f32 -0.5, %v431
    %v456 = vadd.f32 %v455, 1.0
    %v457 = vmul.f32 %v456, %v431
    %v458 = vand.u32 2147483647, %v431
    %vm459 = vcmp.lt.f32.partialorder %v458, 0.0004427343
    %v460 = vsel %vm459, %v457, %v454
    %v461 = vadd.f32 %v433, 1.0
    %v462 = vlog2.pop %v461
    %v463 = vmul.f32 %v462, 0.6931472
    %v464 = vmul.f32 -0.5, %v433
    %v465 = vadd.f32 %v464, 1.0
    %v466 = vmul.f32 %v465, %v433
    %v467 = vand.u32 2147483647, %v433
    %vm468 = vcmp.lt.f32.partialorder %v467, 0.0004427343
    %v469 = vsel %vm468, %v466, %v463
    %v470 = vadd.f32 %v414, %v442
    %v471 = vadd.f32 %v415, %v451
    %v472 = vadd.f32 %v416, %v460
    %v473 = vadd.f32 %v417, %v469
    %v474 = vld [vmem:[%s5] sm:$0x3f]
    %v475 = vld [vmem:[%s6] sm:$0x3f]
    %477 = vset.pattern.permute.xlu0 0
    %478 = vperm.xlu0 %477, %v475
    %v479 = vpop.permute.xlu0 %478
    %v482 = vsel %vm316, %v474, 0
    %484 = vmatprep.subr.mxu0 0.0
    %485 = vmatpush1.msra.mxu0 %v470
    %486 = vmatprep.subr.mxu0 0.0
    %487 = vmatpush1.msra.mxu0 %v471
    %488 = vmatprep.subr.mxu0 0.0
    %489 = vmatpush1.msra.mxu0 %v472
    %490 = vmatprep.subr.mxu0 0.0
    %491 = vmatpush1.msra.mxu0 %v473
    %492 = vmatprep.subr.mxu0 0.0
    %493 = vmatpush1.msra.mxu0 0.0
    %494 = vmatprep.subr.mxu0 0.0
    %495 = vmatpush1.msra.mxu0 0.0
    %496 = vmatprep.subr.mxu0 0.0
    %497 = vmatpush1.msra.mxu0 0.0
    %498 = vmatprep.subr.mxu0 0.0
    %499 = vmatpush1.msra.mxu0 0.0
    %500 = vmatprep.subr.mxu0 0.0
    %501 = vmatpush1.msra.mxu0 0.0
    %502 = vmatprep.subr.mxu0 0.0
    %503 = vmatpush1.msra.mxu0 0.0
    %504 = vmatprep.subr.mxu0 0.0
    %505 = vmatpush1.msra.mxu0 0.0
    %506 = vmatprep.subr.mxu0 0.0
    %507 = vmatpush1.msra.mxu0 0.0
    %508 = vmatprep.subr.mxu0 0.0
    %509 = vmatpush1.msra.mxu0 0.0
    %510 = vmatprep.subr.mxu0 0.0
    %511 = vmatpush1.msra.mxu0 0.0
    %512 = vmatprep.subr.mxu0 0.0
    %513 = vmatpush1.msra.mxu0 0.0
    %514 = vmatprep.subr.mxu0 0.0
    %515 = vmatpush1.msra.mxu0 0.0
    %516 = vmatprep.subr.mxu0 0.0
    %517 = vmatpush1.msra.mxu0 0.0
    %518 = vmatprep.subr.mxu0 0.0
    %519 = vmatpush1.msra.mxu0 0.0
    %520 = vmatprep.subr.mxu0 0.0
    %521 = vmatpush1.msra.mxu0 0.0
    %522 = vmatprep.subr.mxu0 0.0
    %523 = vmatpush1.msra.mxu0 0.0
    %524 = vmatprep.subr.mxu0 0.0
    %525 = vmatpush1.msra.mxu0 0.0
    %526 = vmatprep.subr.mxu0 0.0
    %527 = vmatpush1.msra.mxu0 0.0
    %528 = vmatprep.subr.mxu0 0.0
    %529 = vmatpush1.msra.mxu0 0.0
    %530 = vmatprep.subr.mxu0 0.0
    %531 = vmatpush1.msra.mxu0 0.0
    %532 = vmatprep.subr.mxu0 0.0
    %533 = vmatpush1.msra.mxu0 0.0
    %534 = vmatprep.subr.mxu0 0.0
    %535 = vmatpush1.msra.mxu0 0.0
    %536 = vmatprep.subr.mxu0 0.0
    %537 = vmatpush1.msra.mxu0 0.0
    %538 = vmatprep.subr.mxu0 0.0
    %539 = vmatpush1.msra.mxu0 0.0
    %540 = vmatprep.subr.mxu0 0.0
    %541 = vmatpush1.msra.mxu0 0.0
    %542 = vmatprep.subr.mxu0 0.0
    %543 = vmatpush1.msra.mxu0 0.0
    %544 = vmatprep.subr.mxu0 0.0
    %545 = vmatpush1.msra.mxu0 0.0
    %546 = vmatprep.subr.mxu0 0.0
    %547 = vmatpush1.msra.mxu0 0.0
    %548 = vmatprep.mubr.f32.mxu0 0.0
    %549 = vmatmul.mubr.f32.gmra.mrb[0].mxu0 %v482
    %v550 = vpop.f32.mrb[0].mxu0
    %v551 = vadd.f32 %v479, %v550
    %v552 = vpop.f32.mrb[0].mxu0
    %553 = vdwg.mxu0
    %554 = vst [vmem:[#allocation2] sm:$0x3f] %v551
    // Predicated region
    $region30: #{tpu_custom_call.1} parent=1 // pred_check
      _
    $region31: #{tpu_custom_call.1} parent=1 // pred_check_branch
      %556 = sbr.rel (0) target = $region33
    $region32: #{tpu_custom_call.1} parent=1 // pred_region
      %s558 = ssub.s32 128, 128
      %559 = vsyncadd [#allocation3], %s558
      %s561 = sshll.u32 [#allocation2], 4
      %s562 = int_to_ptr.vmem [resolvable:$true] %s561
      %564 = dma.vmem_to_hbm [thread:$0]  %s562, 128, %s7, [#allocation3]
    $region33: #{tpu_custom_call.1} parent=1 // pred_fallthru
      _
    // Predicated region
    $region34: #{tpu_custom_call.1} parent=1 // pred_check
      _
    $region35: #{tpu_custom_call.1} parent=1 // pred_check_branch
      %566 = sbr.rel (0) target = $region37
    $region36: #{tpu_custom_call.1} parent=1 // pred_region
      %567 = dma.done [#allocation3], 128
    $region37: #{tpu_custom_call.1} parent=1 // pred_fallthru
      _
    %568 = vsyncpa [#allocation3], 1

</llo_original>
